<compile_context>
chip_gen: v7x
topology: tpu7x:2x2x1
jax: 0.10.0
libtpu: 0.0.40
codegen_flags: <defaults>
</compile_context>

<pallas_src>
import functools

import jax
import jax.numpy as jnp
from jax.experimental import pallas as pl
from jax.experimental.pallas import tpu as pltpu


def _l2mae_kernel(x_ref, t_ref, out_ref, acc_ref, *,
                  n_rows, d, tile_n, reduction, need_mask):
    """x_ref/t_ref: (d, tile_n) lane-dense tiles; acc_ref: (1, tile_n) f32."""
    i = pl.program_id(0)

    @pl.when(i == 0)
    def _():
        acc_ref[...] = jnp.zeros_like(acc_ref)

    diff = x_ref[...].astype(jnp.float32) - t_ref[...].astype(jnp.float32)
    sq = diff * diff                                  # (d, tile_n)

    # Unroll the tiny D axis as elementwise adds (pure VPU work, no XLU reduce).
    row_sq = sq[0:1, :]
    for k in range(1, d):
        row_sq = row_sq + sq[k:k + 1, :]              # (1, tile_n)
    dists = jnp.sqrt(row_sq)                          # (1, tile_n)

    if need_mask:
        col = jax.lax.broadcasted_iota(jnp.int32, (1, tile_n), 1)
        valid = (i * tile_n + col) < n_rows
        dists = jnp.where(valid, dists, jnp.float32(0.0))

    # Elementwise lane-dense accumulation each step; reduce only at the end.
    acc_ref[...] += dists

    @pl.when(i == pl.num_programs(0) - 1)
    def _():
        total = jnp.sum(acc_ref[...])                 # single cross-lane reduce
        if reduction == "mean":
            total = total / jnp.float32(n_rows)
        out_ref[0, 0] = total


def ocp_loss(x: jax.Array, t: jax.Array, reduction: str = "mean",
             max_tile: int = 8192) -> jax.Array:
    """L2MAE OCP loss: reduce(||x - t||_2 along last dim) with mean/sum."""
    assert reduction in ("mean", "sum")
    assert x.shape == t.shape and x.ndim == 2
    assert max_tile % 128 == 0
    n, d = x.shape

    # Lane-dense layout: (D, N) so atoms map to the 128-lane axis.
    x_t = x.T
    t_t = t.T

    if n <= max_tile:
        tile_n = n                   # full extent (allowed even if not %128)
    else:
        tile_n = max_tile            # multiple of 128
    grid = pl.cdiv(n, tile_n)
    need_mask = (n % tile_n) != 0

    kernel = functools.partial(
        _l2mae_kernel, n_rows=n, d=d, tile_n=tile_n,
        reduction=reduction, need_mask=need_mask)

    out = pl.pallas_call(
        kernel,
        out_shape=jax.ShapeDtypeStruct((1, 1), jnp.float32),
        grid_spec=pltpu.PrefetchScalarGridSpec(
            num_scalar_prefetch=0,
            grid=(grid,),
            in_specs=[
                pl.BlockSpec((d, tile_n), lambda i: (0, i)),
                pl.BlockSpec((d, tile_n), lambda i: (0, i)),
            ],
            out_specs=pl.BlockSpec(
                (1, 1), lambda i: (0, 0), memory_space=pltpu.SMEM
            ),
            scratch_shapes=[pltpu.VMEM((1, tile_n), jnp.float32)],
        ),
        compiler_params=pltpu.CompilerParams(
            dimension_semantics=("arbitrary",)  # reduction axis
        ),
    )(x_t, t_t)
    return out[0, 0]


if __name__ == "__main__":
    key = jax.random.PRNGKey(0)
    k1, k2, k3, k4 = jax.random.split(key, 4)

    # Small OCP-like shapes: 256 atoms, 3-component force vectors.
    N, D = 256, 3
    x = jax.random.normal(k1, (N, D), dtype=jnp.float32)
    t = jax.random.normal(k2, (N, D), dtype=jnp.float32)

    loss_mean = jax.block_until_ready(ocp_loss(x, t, reduction="mean"))
    loss_sum = jax.block_until_ready(ocp_loss(x, t, reduction="sum"))

    ref_dists = jnp.linalg.norm(x - t, axis=-1)
    assert jnp.allclose(loss_mean, jnp.mean(ref_dists), rtol=1e-5, atol=1e-5), (
        loss_mean, jnp.mean(ref_dists))
    assert jnp.allclose(loss_sum, jnp.sum(ref_dists), rtol=1e-5, atol=1e-5), (
        loss_sum, jnp.sum(ref_dists))

    # Ragged N (not a multiple of the tile) exercises the masked last tile.
    N2 = 300
    x2 = jax.random.normal(k3, (N2, D), dtype=jnp.float32)
    t2 = jax.random.normal(k4, (N2, D), dtype=jnp.float32)
    loss2 = jax.block_until_ready(
        ocp_loss(x2, t2, reduction="mean", max_tile=128))
    ref2 = jnp.mean(jnp.linalg.norm(x2 - t2, axis=-1))
    assert jnp.allclose(loss2, ref2, rtol=1e-5, atol=1e-5), (loss2, ref2)

    print("KERNEL_OK")
</pallas_src>

<mosaic_0001>
module attributes {stable_mosaic.version = 11 : i64} {
  func.func @_l2mae_kernel(%arg0: i32, %arg1: memref<3x256xf32, #tpu.memory_space<vmem>>, %arg2: memref<3x256xf32, #tpu.memory_space<vmem>>, %arg3: memref<1x1xf32, #tpu.memory_space<smem>>, %arg4: memref<1x256xf32, #tpu.memory_space<vmem>>) attributes {dimension_semantics = [#tpu.dimension_semantics<arbitrary>], iteration_bounds = array<i64: 1>, scalar_prefetch = 0 : i64, scratch_operands = 1 : i64, tpu.core_type = #tpu.core_type<tc>, window_params = [{transform_indices = @transform_0, window_bounds = array<i64: 3, 256>}, {transform_indices = @transform_1, window_bounds = array<i64: 3, 256>}, {transform_indices = @transform_2, window_bounds = array<i64: 1, 1>}]} {
    %c0_i32 = arith.constant 0 : i32
    %0 = arith.cmpi eq, %arg0, %c0_i32 : i32
    %1 = arith.extui %0 : i1 to i32
    %c0_i32_0 = arith.constant 0 : i32
    %2 = arith.cmpi ne, %1, %c0_i32_0 : i32
    scf.if %2 {
      %cst = arith.constant 0.000000e+00 : f32
      %19 = vector.broadcast %cst : f32 to vector<1x256xf32>
      %c0_10 = arith.constant 0 : index
      %c0_11 = arith.constant 0 : index
      %20 = vector.load %arg4[%c0_10, %c0_11] : memref<1x256xf32, #tpu.memory_space<vmem>>, vector<1x256xf32>
      tpu.vector_store %arg4[%c0_10, %c0_11], %19 {strides = array<i32>} : memref<1x256xf32, #tpu.memory_space<vmem>>, vector<1x256xf32>,
    } else {
    }
    %c0 = arith.constant 0 : index
    %c0_1 = arith.constant 0 : index
    %3 = vector.load %arg1[%c0, %c0_1] : memref<3x256xf32, #tpu.memory_space<vmem>>, vector<3x256xf32>
    %c0_2 = arith.constant 0 : index
    %c0_3 = arith.constant 0 : index
    %4 = vector.load %arg2[%c0_2, %c0_3] : memref<3x256xf32, #tpu.memory_space<vmem>>, vector<3x256xf32>
    %5 = arith.subf %3, %4 : vector<3x256xf32>
    %6 = arith.mulf %5, %5 : vector<3x256xf32>
    %7 = vector.extract_strided_slice %6 {offsets = [0, 0], sizes = [1, 256], strides = [1, 1]} : vector<3x256xf32> to vector<1x256xf32>
    %8 = vector.extract_strided_slice %6 {offsets = [1, 0], sizes = [1, 256], strides = [1, 1]} : vector<3x256xf32> to vector<1x256xf32>
    %9 = arith.addf %7, %8 : vector<1x256xf32>
    %10 = vector.extract_strided_slice %6 {offsets = [2, 0], sizes = [1, 256], strides = [1, 1]} : vector<3x256xf32> to vector<1x256xf32>
    %11 = arith.addf %9, %10 : vector<1x256xf32>
    %12 = math.sqrt %11 : vector<1x256xf32>
    %c0_4 = arith.constant 0 : index
    %c0_5 = arith.constant 0 : index
    %13 = vector.load %arg4[%c0_4, %c0_5] : memref<1x256xf32, #tpu.memory_space<vmem>>, vector<1x256xf32>
    %14 = arith.addf %13, %12 : vector<1x256xf32>
    %c0_6 = arith.constant 0 : index
    %c0_7 = arith.constant 0 : index
    %15 = vector.load %arg4[%c0_6, %c0_7] : memref<1x256xf32, #tpu.memory_space<vmem>>, vector<1x256xf32>
    tpu.vector_store %arg4[%c0_6, %c0_7], %14 {strides = array<i32>} : memref<1x256xf32, #tpu.memory_space<vmem>>, vector<1x256xf32>,
    %c0_i32_8 = arith.constant 0 : i32
    %16 = arith.cmpi eq, %arg0, %c0_i32_8 : i32
    %17 = arith.extui %16 : i1 to i32
    %c0_i32_9 = arith.constant 0 : i32
    %18 = arith.cmpi ne, %17, %c0_i32_9 : i32
    scf.if %18 {
      %c0_10 = arith.constant 0 : index
      %c0_11 = arith.constant 0 : index
      %19 = vector.load %arg4[%c0_10, %c0_11] : memref<1x256xf32, #tpu.memory_space<vmem>>, vector<1x256xf32>
      %20 = vector.shape_cast %19 : vector<1x256xf32> to vector<1x1x256xf32>
      %cst = arith.constant dense<0.000000e+00> : vector<1xf32>
      %21 = vector.multi_reduction <add>, %20, %cst [1, 2] : vector<1x1x256xf32> to vector<1xf32>
      %22 = vector.shape_cast %21 : vector<1xf32> to vector<1x1x1xf32>
      %23 = vector.extract %22[0, 0, 0] : f32 from vector<1x1x1xf32>
      %cst_12 = arith.constant 2.560000e+02 : f32
      %24 = arith.divf %23, %cst_12 : f32
      %c0_13 = arith.constant 0 : index
      %c0_14 = arith.constant 0 : index
      %25 = memref.load %arg3[%c0_13, %c0_14] : memref<1x1xf32, #tpu.memory_space<smem>>
      memref.store %24, %arg3[%c0_13, %c0_14] : memref<1x1xf32, #tpu.memory_space<smem>>
    } else {
    }
    return
  }
  func.func @transform_0(%arg0: i32) -> (i32, i32) {
    %c0_i32 = arith.constant 0 : i32
    %c0_i32_0 = arith.constant 0 : i32
    return %c0_i32, %arg0 : i32, i32
  }
  func.func @transform_1(%arg0: i32) -> (i32, i32) {
    %c0_i32 = arith.constant 0 : i32
    %c0_i32_0 = arith.constant 0 : i32
    return %c0_i32, %arg0 : i32, i32
  }
  func.func @transform_2(%arg0: i32) -> (i32, i32) {
    %c0_i32 = arith.constant 0 : i32
    %c0_i32_0 = arith.constant 0 : i32
    %c0_i32_1 = arith.constant 0 : i32
    return %c0_i32, %c0_i32_0 : i32, i32
  }
}

</mosaic_0001>

<llo_original>
// kernel: tpu_custom_call.1
$region0: #{tpu_custom_call.1}
  #allocation0 [shape = 'u32[]', space=smem, size = 0x4, offset = 0x4, fixed_abs, tag = 'smem constant byte address 0x4 - core index']
  #allocation1 [shape = 'u32[144,128]{1,0:T(1,128)}', space=vmem, size = 0x12000, scoped, tag = 'internal scratch']
  #allocation2 [shape = 'f32[1,256]{1,0:T(1,128)}', space=vmem, size = 0x400, scoped, tag = 'scratch operand']
  %s0 = inlined_call_operand.hbm [shape: f32[3,256], index: 0, kind: input, shape index: {}]
  %s1 = inlined_call_operand.hbm [shape: f32[3,256], index: 1, kind: input, shape index: {}]
  %s2 = inlined_call_operand.hbm [shape: f32[1,1], index: 2, kind: output, shape index: {}]
  %s3 = sld [smem:[#allocation0]]
  $region34: #{tpu_custom_call.1} parent=0
    _
  %s5 = ssub.s32 1, %s3
  %s6 = scalar_select 0, %s5, %s3
  $region1: #{tpu_custom_call.1} parent=0
    #allocation3 [shape = 'u8[4096]{0}', space=vmem, size = 0x1000, scoped, tag = 'input window, operand 0, single buffered']
    #allocation4 [shape = 's32[1]{0}', space=sflag, size = 0x4, scoped, tag = 'scoped memory for tpu_custom_call.1']
    #allocation5 [shape = 's32[1]{0}', space=sflag, size = 0x4, scoped, tag = 'scoped memory for tpu_custom_call.1']
    #allocation6 [shape = 'u8[4096]{0}', space=vmem, size = 0x1000, scoped, tag = 'input window, operand 1, single buffered']
    #allocation7 [shape = 's32[1]{0}', space=sflag, size = 0x4, scoped, tag = 'scoped memory for tpu_custom_call.1']
    #allocation8 [shape = 'u8[512]{0}', space=smem, size = 0x200, scoped, tag = 'output window, operand 0, single buffered']
    %7 = vsyncpa [#allocation4], 0
    %8 = vsyncpa [#allocation7], 0
    %9 = vsyncpa [#allocation5], 0
    // Predicated region
    $region2: #{tpu_custom_call.1} parent=1 // pred_check
      _
    $region3: #{tpu_custom_call.1} parent=1 // pred_check_branch
      %11 = sbr.rel (0) target = $region5
    $region4: #{tpu_custom_call.1} parent=1 // pred_region
      %s13 = ssub.s32 128, 128
      %14 = vsyncadd [#allocation4], %s13
      %s16 = sshll.u32 [#allocation3], 4
      %s17 = int_to_ptr.vmem [resolvable:$true] %s16
      %19 = dma.hbm_to_vmem [thread:$0]  %s0, 128, %s17, [#allocation4]
    $region5: #{tpu_custom_call.1} parent=1 // pred_fallthru
      _
    // Predicated region
    $region6: #{tpu_custom_call.1} parent=1 // pred_check
      _
    $region7: #{tpu_custom_call.1} parent=1 // pred_check_branch
      %21 = sbr.rel (0) target = $region9
    $region8: #{tpu_custom_call.1} parent=1 // pred_region
      %s23 = ssub.s32 128, 128
      %24 = vsyncadd [#allocation7], %s23
      %s26 = sshll.u32 [#allocation6], 4
      %s27 = int_to_ptr.vmem [resolvable:$true] %s26
      %29 = dma.hbm_to_vmem [thread:$0]  %s1, 128, %s27, [#allocation7]
    $region9: #{tpu_custom_call.1} parent=1 // pred_fallthru
      _
    // Predicated region
    $region10: #{tpu_custom_call.1} parent=1 // pred_check
      _
    $region11: #{tpu_custom_call.1} parent=1 // pred_check_branch
      %31 = sbr.rel (0) target = $region13
    $region12: #{tpu_custom_call.1} parent=1 // pred_region
      %32 = dma.done [#allocation4], 128
    $region13: #{tpu_custom_call.1} parent=1 // pred_fallthru
      _
    // Predicated region
    $region14: #{tpu_custom_call.1} parent=1 // pred_check
      _
    $region15: #{tpu_custom_call.1} parent=1 // pred_check_branch
      %34 = sbr.rel (0) target = $region17
    $region16: #{tpu_custom_call.1} parent=1 // pred_region
      %35 = dma.done [#allocation7], 128
    $region17: #{tpu_custom_call.1} parent=1 // pred_fallthru
      _
    %p36 = scmp.eq.s32.totalorder 0, 0
    // Predicated region
    $region18: #{tpu_custom_call.1} parent=1 // pred_check
      %p37 = pneg %p36
    $region19: #{tpu_custom_call.1} parent=1 // pred_check_branch
      %39 = sbr.rel (%p37) target = $region21
    $region20: #{tpu_custom_call.1} parent=1 // pred_region
      %v40 = vlaneseq
      %vm41 = vcmp.ge.s32.totalorder %v40, 0
      %vm42 = vcmp.lt.s32.totalorder %v40, 256
      %vm43 = vmand %vm41, %vm42
      %44 = vst.msk [vmem:[#allocation2] sm:$0x3] %vm43, 0.0
    $region21: #{tpu_custom_call.1} parent=1 // pred_fallthru
      _
    %v45 = vld [vmem:[#allocation3] sm:$0x77]
    %v46 = vld [vmem:[#allocation6] sm:$0x77]
    %v47 = vsub.f32 %v45, %v46
    %v48 = vmul.f32 %v47, %v47
    %v50 = vrot.slane %v48, 5
    %v51 = vrot.slane %v50, 4
    %v53 = vadd.f32 %v48, %v51
    %v54 = vrot.slane %v48, 6
    %v55 = vrot.slane %v54, 4
    %v57 = vadd.f32 %v53, %v55
    %v58 = vrsqrt.pop %v57
    %v59 = vmul.f32 %v57, %v58
    %vm60 = vcmp.eq.f32.partialorder %v57, inf
    %v61 = vsel %vm60, %v57, %v59
    %vm62 = vcmp.eq.f32.partialorder %v57, 0.0
    %v63 = vand.u32 %v57, 2147483648
    %v64 = vsel %vm62, %v63, %v61
    %v65 = vld [vmem:[#allocation2] sm:$0x3]
    %v68 = vunpack.c.l.s4 1966171168
    %v69 = vunpack.c.0.s8 %v68
    %v70 = vlaneseq
    %v71 = vshrl.u32 %v70, 7
    %v72 = vsub.s32 %v69, %v71
    %v73 = vrot.slane %v64, %v72
    %v75 = vunpack.c.l.s4 1966171168
    %v76 = vunpack.c.0.s8 %v75
    %v77 = vlaneseq
    %v78 = vshrl.u32 %v77, 7
    %v79 = vsub.s32 %v76, %v78
    %v80 = vrot.slane %v73, %v79
    %v82 = vadd.f32 %v65, %v80
    %v83 = vlaneseq
    %vm84 = vcmp.ge.s32.totalorder %v83, 0
    %vm85 = vcmp.lt.s32.totalorder %v83, 256
    %vm86 = vmand %vm84, %vm85
    %87 = vst.msk [vmem:[#allocation2] sm:$0x3] %vm86, %v82
    // Predicated region
    $region22: #{tpu_custom_call.1} parent=1 // pred_check
      %p88 = pneg %p36
    $region23: #{tpu_custom_call.1} parent=1 // pred_check_branch
      %90 = sbr.rel (%p88) target = $region25
    $region24: #{tpu_custom_call.1} parent=1 // pred_region
      %v91 = vld [vmem:[#allocation2] sm:$0x3]
      %v93 = vlaneseq
      %v94 = vshrl.u32 %v93, 7
      %v95 = vsub.s32 0, %v94
      %v96 = vrot.slane %v91, %v95
      %v97 = vlaneseq
      %v98 = vshrl.u32 %v97, 7
      %v99 = vsub.s32 1, %v98
      %v100 = vrot.slane %v91, %v99
      %vm103 = vcmask 1040384
      %v104 = vsel %vm103, %v96, 0.0
      %v105 = vsel %vm103, %v100, 0.0
      %v106 = vadd.f32 %v104, %v105
      %107 = vadd.xlane.f32.xlu0 %v106
      %v108 = vpop.xlane.xlu0 %107
      %v109 = vrot.slane %v108, 4
      %v110 = vadd.f32 %v108, %v109
      %v111 = vrot.slane %v110, 2
      %v112 = vadd.f32 %v110, %v111
      %v113 = vrot.slane %v112, 1
      %v114 = vadd.f32 %v112, %v113
      %s115 = vtos %v114
      %v116 = vrcp.pop 256.0
      %s117 = vtos %v116
      %s118 = smul.f32 %s115, %s117
      %s119 = scalar_lea.smem [#allocation8], 0
      %120 = sst [smem:[%s119]] %s118
    $region25: #{tpu_custom_call.1} parent=1 // pred_fallthru
      _
    // Predicated region
    $region26: #{tpu_custom_call.1} parent=1 // pred_check
      _
    $region27: #{tpu_custom_call.1} parent=1 // pred_check_branch
      %122 = sbr.rel (0) target = $region29
    $region28: #{tpu_custom_call.1} parent=1 // pred_region
      %s124 = ssub.s32 16, 16
      %125 = vsyncadd [#allocation5], %s124
      %128 = dma.smem_to_hbm [#allocation8], 16, %s2, [#allocation5]
    $region29: #{tpu_custom_call.1} parent=1 // pred_fallthru
      _
    // Predicated region
    $region30: #{tpu_custom_call.1} parent=1 // pred_check
      _
    $region31: #{tpu_custom_call.1} parent=1 // pred_check_branch
      %130 = sbr.rel (0) target = $region33
    $region32: #{tpu_custom_call.1} parent=1 // pred_region
      %131 = dma.done [#allocation5], 16
    $region33: #{tpu_custom_call.1} parent=1 // pred_fallthru
      _
    %132 = sfence
    %133 = vsyncpa [#allocation4], 1
    %134 = vsyncpa [#allocation7], 1
    %135 = vsyncpa [#allocation5], 1

</llo_original>
